<compile_context>
chip_gen: v7x
topology: tpu7x:2x2x1
jax: 0.10.0
libtpu: 0.0.40
codegen_flags: <defaults>
</compile_context>

<pallas_src>
import functools

import jax
import jax.numpy as jnp
from jax.experimental import pallas as pl
from jax.experimental.pallas import tpu as pltpu

BN_EPS = 1e-5


# ----------------------------------------------------------------------------
# Pass 1: conv1x1 for g and x, accumulate per-channel sum / sumsq (BN stats).
# ----------------------------------------------------------------------------
def _stats_kernel(g_ref, x_ref, wg_ref, bg_ref, wx_ref, bx_ref,
                  sum_g_ref, sq_g_ref, sum_x_ref, sq_x_ref,
                  *, r_valid, r_tile):
    pid = pl.program_id(0)

    @pl.when(pid == 0)
    def _():
        sum_g_ref[...] = jnp.zeros_like(sum_g_ref)
        sq_g_ref[...] = jnp.zeros_like(sq_g_ref)
        sum_x_ref[...] = jnp.zeros_like(sum_x_ref)
        sq_x_ref[...] = jnp.zeros_like(sq_x_ref)

    # Mask off lane-padding columns (only matters for the last tile).
    col = jax.lax.broadcasted_iota(jnp.int32, (1, r_tile), 1) + pid * r_tile
    mask = (col < r_valid).astype(jnp.float32)

    g1 = jnp.dot(wg_ref[...], g_ref[...],
                 preferred_element_type=jnp.float32) + bg_ref[...]
    x1 = jnp.dot(wx_ref[...], x_ref[...],
                 preferred_element_type=jnp.float32) + bx_ref[...]
    g1 = g1 * mask
    x1 = x1 * mask

    sum_g_ref[...] += jnp.sum(g1, axis=1, keepdims=True)
    sq_g_ref[...] += jnp.sum(g1 * g1, axis=1, keepdims=True)
    sum_x_ref[...] += jnp.sum(x1, axis=1, keepdims=True)
    sq_x_ref[...] += jnp.sum(x1 * x1, axis=1, keepdims=True)


# ----------------------------------------------------------------------------
# Pass 2: BN-folded convs -> relu -> psi conv; emit s and accumulate its stats.
# ----------------------------------------------------------------------------
def _psi_kernel(g_ref, x_ref, wg_ref, bg_ref, wx_ref, bx_ref,
                wpsi_ref, bpsi_ref,
                s_ref, psum_ref, psq_ref, *, r_valid, r_tile):
    pid = pl.program_id(0)

    @pl.when(pid == 0)
    def _():
        psum_ref[...] = jnp.zeros_like(psum_ref)
        psq_ref[...] = jnp.zeros_like(psq_ref)

    col = jax.lax.broadcasted_iota(jnp.int32, (1, r_tile), 1) + pid * r_tile
    mask = (col < r_valid).astype(jnp.float32)

    # wg/bg, wx/bx here already have the BatchNorm scale/shift folded in.
    g1 = jnp.dot(wg_ref[...], g_ref[...],
                 preferred_element_type=jnp.float32) + bg_ref[...]
    x1 = jnp.dot(wx_ref[...], x_ref[...],
                 preferred_element_type=jnp.float32) + bx_ref[...]
    p = jnp.maximum(g1 + x1, 0.0)                       # (Ci, r_tile), f32
    s = jnp.dot(wpsi_ref[...], p,
                preferred_element_type=jnp.float32) + bpsi_ref[...]  # (1, r_tile)
    s_ref[...] = s

    sm = s * mask
    psum_ref[...] += jnp.sum(sm, axis=1, keepdims=True)
    psq_ref[...] += jnp.sum(sm * sm, axis=1, keepdims=True)


# ----------------------------------------------------------------------------
# Pass 3: psi = sigmoid(scale*s + shift);  out = x * psi   (fully parallel).
# ----------------------------------------------------------------------------
def _gate_kernel(x_ref, s_ref, scale_ref, shift_ref, out_ref):
    psi = jax.nn.sigmoid(s_ref[...] * scale_ref[...] + shift_ref[...])  # (1, rt)
    out_ref[...] = (x_ref[...] * psi).astype(out_ref.dtype)


# ----------------------------------------------------------------------------
# Wrapper
# ----------------------------------------------------------------------------
def attention_gate_pallas(x, g, params, *, r_tile=256):
    N, Cx, H, W = x.shape
    Ng, Cg, Hg, Wg_ = g.shape
    assert (N, H, W) == (Ng, Hg, Wg_), "x and g must share N, H, W"
    Ci = params["wg"].shape[0]

    R = N * H * W
    T = pl.cdiv(R, r_tile)
    R_pad = T * r_tile

    # --- glue: NCHW -> (C, N*H*W), pad the lane (row) axis to the tile grid ---
    def to_cr(a):
        C = a.shape[1]
        a = jnp.transpose(a, (1, 0, 2, 3)).reshape(C, R)
        return jnp.pad(a, ((0, 0), (0, R_pad - R)))

    x_cr_f32 = to_cr(x).astype(jnp.float32)
    x_cr_bf = x_cr_f32.astype(jnp.bfloat16)
    g_cr_bf = to_cr(g).astype(jnp.bfloat16)

    wg = params["wg"].reshape(Ci, Cg).astype(jnp.float32)
    wx = params["wx"].reshape(Ci, Cx).astype(jnp.float32)
    wpsi = params["wpsi"].reshape(1, Ci).astype(jnp.float32)
    bg = params["bg"].reshape(Ci, 1).astype(jnp.float32)
    bx = params["bx"].reshape(Ci, 1).astype(jnp.float32)
    bpsi = params["bpsi"].reshape(1, 1).astype(jnp.float32)

    grid = (T,)
    row_spec = lambda C: pl.BlockSpec((C, r_tile), lambda i: (0, i))
    full_spec = lambda shape: pl.BlockSpec(shape, lambda i: tuple(0 for _ in shape))

    # ---------------- pass 1: BN stats for g1 and x1 ----------------
    sum_g, sq_g, sum_x, sq_x = pl.pallas_call(
        functools.partial(_stats_kernel, r_valid=R, r_tile=r_tile),
        grid=grid,
        in_specs=[row_spec(Cg), row_spec(Cx),
                  full_spec((Ci, Cg)), full_spec((Ci, 1)),
                  full_spec((Ci, Cx)), full_spec((Ci, 1))],
        out_specs=[full_spec((Ci, 1))] * 4,
        out_shape=[jax.ShapeDtypeStruct((Ci, 1), jnp.float32)] * 4,
        compiler_params=pltpu.CompilerParams(dimension_semantics=("arbitrary",)),
    )(g_cr_bf, x_cr_bf,
      wg.astype(jnp.bfloat16), bg, wx.astype(jnp.bfloat16), bx)

    # Finalize BN: scale = gamma*rsqrt(var+eps), shift = beta - mean*scale.
    def bn_scale_shift(s, sq, gamma, beta):
        mean = s / R
        var = jnp.maximum(sq / R - mean * mean, 0.0)   # biased batch variance
        scale = gamma.reshape(-1, 1).astype(jnp.float32) * jax.lax.rsqrt(var + BN_EPS)
        shift = beta.reshape(-1, 1).astype(jnp.float32) - mean * scale
        return scale, shift

    scale_g, shift_g = bn_scale_shift(sum_g, sq_g, params["gamma_g"], params["beta_g"])
    scale_x, shift_x = bn_scale_shift(sum_x, sq_x, params["gamma_x"], params["beta_x"])

    # Fold BN affine into the 1x1 conv weights/bias for the second sweep.
    wg_eff = (scale_g * wg).astype(jnp.bfloat16)
    bg_eff = scale_g * bg + shift_g
    wx_eff = (scale_x * wx).astype(jnp.bfloat16)
    bx_eff = scale_x * bx + shift_x

    # ---------------- pass 2: s = conv_psi(relu(g1n + x1n)), psi stats -------
    s_out, psum, psq = pl.pallas_call(
        functools.partial(_psi_kernel, r_valid=R, r_tile=r_tile),
        grid=grid,
        in_specs=[row_spec(Cg), row_spec(Cx),
                  full_spec((Ci, Cg)), full_spec((Ci, 1)),
                  full_spec((Ci, Cx)), full_spec((Ci, 1)),
                  full_spec((1, Ci)), full_spec((1, 1))],
        out_specs=[pl.BlockSpec((1, r_tile), lambda i: (0, i)),
                   full_spec((1, 1)), full_spec((1, 1))],
        out_shape=[jax.ShapeDtypeStruct((1, R_pad), jnp.float32),
                   jax.ShapeDtypeStruct((1, 1), jnp.float32),
                   jax.ShapeDtypeStruct((1, 1), jnp.float32)],
        compiler_params=pltpu.CompilerParams(dimension_semantics=("arbitrary",)),
    )(g_cr_bf, x_cr_bf, wg_eff, bg_eff, wx_eff, bx_eff, wpsi, bpsi)

    scale_p, shift_p = bn_scale_shift(psum, psq, params["gamma_psi"], params["beta_psi"])

    # ---------------- pass 3: out = x * sigmoid(BN(s)) -----------------------
    out_cr = pl.pallas_call(
        _gate_kernel,
        grid=grid,
        in_specs=[row_spec(Cx),
                  pl.BlockSpec((1, r_tile), lambda i: (0, i)),
                  full_spec((1, 1)), full_spec((1, 1))],
        out_specs=pl.BlockSpec((Cx, r_tile), lambda i: (0, i)),
        out_shape=jax.ShapeDtypeStruct((Cx, R_pad), jnp.float32),
        compiler_params=pltpu.CompilerParams(dimension_semantics=("parallel",)),
    )(x_cr_f32, s_out, scale_p, shift_p)

    out = out_cr[:, :R].reshape(Cx, N, H, W)
    return jnp.transpose(out, (1, 0, 2, 3))


# ----------------------------------------------------------------------------
# Pure-JAX reference (training-mode BatchNorm, like the PyTorch forward)
# ----------------------------------------------------------------------------
def _conv1x1_ref(x, w, b):
    Co, Ci = w.shape[0], w.shape[1]
    y = jnp.einsum("nchw,oc->nohw", x, w.reshape(Co, Ci))
    return y + b.reshape(1, -1, 1, 1)


def _bn_train_ref(y, gamma, beta):
    mean = y.mean(axis=(0, 2, 3), keepdims=True)
    var = ((y - mean) ** 2).mean(axis=(0, 2, 3), keepdims=True)
    yn = (y - mean) * jax.lax.rsqrt(var + BN_EPS)
    return yn * gamma.reshape(1, -1, 1, 1) + beta.reshape(1, -1, 1, 1)


def attention_gate_ref(x, g, params):
    g1 = _bn_train_ref(_conv1x1_ref(g, params["wg"], params["bg"]),
                       params["gamma_g"], params["beta_g"])
    x1 = _bn_train_ref(_conv1x1_ref(x, params["wx"], params["bx"]),
                       params["gamma_x"], params["beta_x"])
    p = jnp.maximum(g1 + x1, 0.0)
    s = _bn_train_ref(_conv1x1_ref(p, params["wpsi"], params["bpsi"]),
                      params["gamma_psi"], params["beta_psi"])
    return x * jax.nn.sigmoid(s)


if __name__ == "__main__":
    # AttentionGate(in_channels_x=8, in_channels_g=8, inter_channels=4)
    N, Cx, Cg, Ci, H, W = 2, 8, 8, 4, 14, 14   # R = 392 -> exercises 2 tiles + mask

    key = jax.random.PRNGKey(0)
    ks = jax.random.split(key, 12)
    params = {
        "wg": 0.2 * jax.random.normal(ks[0], (Ci, Cg, 1, 1), jnp.float32),
        "bg": 0.1 * jax.random.normal(ks[1], (Ci,), jnp.float32),
        "gamma_g": 1.0 + 0.1 * jax.random.normal(ks[2], (Ci,), jnp.float32),
        "beta_g": 0.1 * jax.random.normal(ks[3], (Ci,), jnp.float32),
        "wx": 0.2 * jax.random.normal(ks[4], (Ci, Cx, 1, 1), jnp.float32),
        "bx": 0.1 * jax.random.normal(ks[5], (Ci,), jnp.float32),
        "gamma_x": 1.0 + 0.1 * jax.random.normal(ks[6], (Ci,), jnp.float32),
        "beta_x": 0.1 * jax.random.normal(ks[7], (Ci,), jnp.float32),
        "wpsi": 0.2 * jax.random.normal(ks[8], (1, Ci, 1, 1), jnp.float32),
        "bpsi": 0.1 * jax.random.normal(ks[9], (1,), jnp.float32),
        "gamma_psi": jnp.ones((1,), jnp.float32),
        "beta_psi": jnp.zeros((1,), jnp.float32),
    }
    x = jax.random.normal(ks[10], (N, Cx, H, W), jnp.float32)
    g = jax.random.normal(ks[11], (N, Cg, H, W), jnp.float32)

    out = jax.block_until_ready(attention_gate_pallas(x, g, params))
    ref = jax.block_until_ready(attention_gate_ref(x, g, params))

    assert out.shape == x.shape, out.shape
    max_err = float(jnp.max(jnp.abs(out - ref)))
    assert max_err < 0.1, f"max abs err too large: {max_err}"

    print("KERNEL_OK")
</pallas_src>

<mosaic_0001>
module attributes {stable_mosaic.version = 11 : i64} {
  func.func @_stats_kernel(%arg0: i32, %arg1: memref<8x256xbf16, #tpu.memory_space<vmem>>, %arg2: memref<8x256xbf16, #tpu.memory_space<vmem>>, %arg3: memref<4x8xbf16, #tpu.memory_space<vmem>>, %arg4: memref<4x1xf32, #tpu.memory_space<vmem>>, %arg5: memref<4x8xbf16, #tpu.memory_space<vmem>>, %arg6: memref<4x1xf32, #tpu.memory_space<vmem>>, %arg7: memref<4x1xf32, #tpu.memory_space<vmem>>, %arg8: memref<4x1xf32, #tpu.memory_space<vmem>>, %arg9: memref<4x1xf32, #tpu.memory_space<vmem>>, %arg10: memref<4x1xf32, #tpu.memory_space<vmem>>) attributes {dimension_semantics = [#tpu.dimension_semantics<arbitrary>], iteration_bounds = array<i64: 2>, scalar_prefetch = 0 : i64, scratch_operands = 0 : i64, tpu.core_type = #tpu.core_type<tc>, window_params = [{transform_indices = @transform_0, window_bounds = array<i64: 8, 256>}, {transform_indices = @transform_1, window_bounds = array<i64: 8, 256>}, {pipeline_mode = #tpu.pipeline_mode<synchronous>, transform_indices = @transform_2, window_bounds = array<i64: 4, 8>}, {pipeline_mode = #tpu.pipeline_mode<synchronous>, transform_indices = @transform_3, window_bounds = array<i64: 4, 1>}, {pipeline_mode = #tpu.pipeline_mode<synchronous>, transform_indices = @transform_4, window_bounds = array<i64: 4, 8>}, {pipeline_mode = #tpu.pipeline_mode<synchronous>, transform_indices = @transform_5, window_bounds = array<i64: 4, 1>}, {pipeline_mode = #tpu.pipeline_mode<synchronous>, transform_indices = @transform_6, window_bounds = array<i64: 4, 1>}, {pipeline_mode = #tpu.pipeline_mode<synchronous>, transform_indices = @transform_7, window_bounds = array<i64: 4, 1>}, {pipeline_mode = #tpu.pipeline_mode<synchronous>, transform_indices = @transform_8, window_bounds = array<i64: 4, 1>}, {pipeline_mode = #tpu.pipeline_mode<synchronous>, transform_indices = @transform_9, window_bounds = array<i64: 4, 1>}]} {
    %c0_i32 = arith.constant 0 : i32
    %0 = arith.cmpi eq, %arg0, %c0_i32 : i32
    %1 = arith.extui %0 : i1 to i32
    %c0_i32_0 = arith.constant 0 : i32
    %2 = arith.cmpi ne, %1, %c0_i32_0 : i32
    scf.if %2 {
      %cst_33 = arith.constant 0.000000e+00 : f32
      %49 = vector.broadcast %cst_33 : f32 to vector<4x1xf32>
      %c0_34 = arith.constant 0 : index
      %c0_35 = arith.constant 0 : index
      %50 = vector.load %arg7[%c0_34, %c0_35] : memref<4x1xf32, #tpu.memory_space<vmem>>, vector<4x1xf32>
      tpu.vector_store %arg7[%c0_34, %c0_35], %49 {strides = array<i32>} : memref<4x1xf32, #tpu.memory_space<vmem>>, vector<4x1xf32>,
      %cst_36 = arith.constant 0.000000e+00 : f32
      %51 = vector.broadcast %cst_36 : f32 to vector<4x1xf32>
      %c0_37 = arith.constant 0 : index
      %c0_38 = arith.constant 0 : index
      %52 = vector.load %arg8[%c0_37, %c0_38] : memref<4x1xf32, #tpu.memory_space<vmem>>, vector<4x1xf32>
      tpu.vector_store %arg8[%c0_37, %c0_38], %51 {strides = array<i32>} : memref<4x1xf32, #tpu.memory_space<vmem>>, vector<4x1xf32>,
      %cst_39 = arith.constant 0.000000e+00 : f32
      %53 = vector.broadcast %cst_39 : f32 to vector<4x1xf32>
      %c0_40 = arith.constant 0 : index
      %c0_41 = arith.constant 0 : index
      %54 = vector.load %arg9[%c0_40, %c0_41] : memref<4x1xf32, #tpu.memory_space<vmem>>, vector<4x1xf32>
      tpu.vector_store %arg9[%c0_40, %c0_41], %53 {strides = array<i32>} : memref<4x1xf32, #tpu.memory_space<vmem>>, vector<4x1xf32>,
      %cst_42 = arith.constant 0.000000e+00 : f32
      %55 = vector.broadcast %cst_42 : f32 to vector<4x1xf32>
      %c0_43 = arith.constant 0 : index
      %c0_44 = arith.constant 0 : index
      %56 = vector.load %arg10[%c0_43, %c0_44] : memref<4x1xf32, #tpu.memory_space<vmem>>, vector<4x1xf32>
      tpu.vector_store %arg10[%c0_43, %c0_44], %55 {strides = array<i32>} : memref<4x1xf32, #tpu.memory_space<vmem>>, vector<4x1xf32>,
    } else {
    }
    %3 = tpu.iota {dimensions = array<i32: 1>} : vector<1x256xi32>
    %c256_i32 = arith.constant 256 : i32
    %4 = arith.muli %arg0, %c256_i32 : i32
    %5 = vector.broadcast %4 : i32 to vector<1x256xi32>
    %6 = arith.addi %3, %5 : vector<1x256xi32>
    %c392_i32 = arith.constant 392 : i32
    %7 = vector.broadcast %c392_i32 : i32 to vector<1x256xi32>
    %8 = arith.cmpi slt, %6, %7 : vector<1x256xi32>
    %9 = arith.extui %8 : vector<1x256xi1> to vector<1x256xi32>
    %10 = arith.sitofp %9 : vector<1x256xi32> to vector<1x256xf32>
    %c0 = arith.constant 0 : index
    %c0_1 = arith.constant 0 : index
    %11 = vector.load %arg3[%c0, %c0_1] : memref<4x8xbf16, #tpu.memory_space<vmem>>, vector<4x8xbf16>
    %c0_2 = arith.constant 0 : index
    %c0_3 = arith.constant 0 : index
    %12 = vector.load %arg1[%c0_2, %c0_3] : memref<8x256xbf16, #tpu.memory_space<vmem>>, vector<8x256xbf16>
    %cst = arith.constant dense<0.000000e+00> : vector<4x256xf32>
    %13 = tpu.matmul %11, %12, %cst {dimension_numbers = #tpu.dot_dimension_numbers<[1], [0], [0], [1], [0, 0, 1, 1], [], []>} : vector<4x8xbf16>, vector<8x256xbf16>, vector<4x256xf32> -> vector<4x256xf32>
    %c0_4 = arith.constant 0 : index
    %c0_5 = arith.constant 0 : index
    %14 = vector.load %arg4[%c0_4, %c0_5] : memref<4x1xf32, #tpu.memory_space<vmem>>, vector<4x1xf32>
    %15 = vector.broadcast %14 : vector<4x1xf32> to vector<4x256xf32>
    %16 = arith.addf %13, %15 : vector<4x256xf32>
    %c0_6 = arith.constant 0 : index
    %c0_7 = arith.constant 0 : index
    %17 = vector.load %arg5[%c0_6, %c0_7] : memref<4x8xbf16, #tpu.memory_space<vmem>>, vector<4x8xbf16>
    %c0_8 = arith.constant 0 : index
    %c0_9 = arith.constant 0 : index
    %18 = vector.load %arg2[%c0_8, %c0_9] : memref<8x256xbf16, #tpu.memory_space<vmem>>, vector<8x256xbf16>
    %cst_10 = arith.constant dense<0.000000e+00> : vector<4x256xf32>
    %19 = tpu.matmul %17, %18, %cst_10 {dimension_numbers = #tpu.dot_dimension_numbers<[1], [0], [0], [1], [0, 0, 1, 1], [], []>} : vector<4x8xbf16>, vector<8x256xbf16>, vector<4x256xf32> -> vector<4x256xf32>
    %c0_11 = arith.constant 0 : index
    %c0_12 = arith.constant 0 : index
    %20 = vector.load %arg6[%c0_11, %c0_12] : memref<4x1xf32, #tpu.memory_space<vmem>>, vector<4x1xf32>
    %21 = vector.broadcast %20 : vector<4x1xf32> to vector<4x256xf32>
    %22 = arith.addf %19, %21 : vector<4x256xf32>
    %23 = vector.broadcast %10 : vector<1x256xf32> to vector<4x256xf32>
    %24 = arith.mulf %16, %23 : vector<4x256xf32>
    %25 = vector.broadcast %10 : vector<1x256xf32> to vector<4x256xf32>
    %26 = arith.mulf %22, %25 : vector<4x256xf32>
    %c0_13 = arith.constant 0 : index
    %c0_14 = arith.constant 0 : index
    %27 = vector.load %arg7[%c0_13, %c0_14] : memref<4x1xf32, #tpu.memory_space<vmem>>, vector<4x1xf32>
    %cst_15 = arith.constant dense<0.000000e+00> : vector<4xf32>
    %28 = vector.multi_reduction <add>, %24, %cst_15 [1] : vector<4x256xf32> to vector<4xf32>
    %29 = vector.shape_cast %28 : vector<4xf32> to vector<4x1xf32>
    %30 = arith.addf %27, %29 : vector<4x1xf32>
    %c0_16 = arith.constant 0 : index
    %c0_17 = arith.constant 0 : index
    %31 = vector.load %arg7[%c0_16, %c0_17] : memref<4x1xf32, #tpu.memory_space<vmem>>, vector<4x1xf32>
    tpu.vector_store %arg7[%c0_16, %c0_17], %30 {strides = array<i32>} : memref<4x1xf32, #tpu.memory_space<vmem>>, vector<4x1xf32>,
    %c0_18 = arith.constant 0 : index
    %c0_19 = arith.constant 0 : index
    %32 = vector.load %arg8[%c0_18, %c0_19] : memref<4x1xf32, #tpu.memory_space<vmem>>, vector<4x1xf32>
    %33 = arith.mulf %24, %24 : vector<4x256xf32>
    %cst_20 = arith.constant dense<0.000000e+00> : vector<4xf32>
    %34 = vector.multi_reduction <add>, %33, %cst_20 [1] : vector<4x256xf32> to vector<4xf32>
    %35 = vector.shape_cast %34 : vector<4xf32> to vector<4x1xf32>
    %36 = arith.addf %32, %35 : vector<4x1xf32>
    %c0_21 = arith.constant 0 : index
    %c0_22 = arith.constant 0 : index
    %37 = vector.load %arg8[%c0_21, %c0_22] : memref<4x1xf32, #tpu.memory_space<vmem>>, vector<4x1xf32>
    tpu.vector_store %arg8[%c0_21, %c0_22], %36 {strides = array<i32>} : memref<4x1xf32, #tpu.memory_space<vmem>>, vector<4x1xf32>,
    %c0_23 = arith.constant 0 : index
    %c0_24 = arith.constant 0 : index
    %38 = vector.load %arg9[%c0_23, %c0_24] : memref<4x1xf32, #tpu.memory_space<vmem>>, vector<4x1xf32>
    %cst_25 = arith.constant dense<0.000000e+00> : vector<4xf32>
    %39 = vector.multi_reduction <add>, %26, %cst_25 [1] : vector<4x256xf32> to vector<4xf32>
    %40 = vector.shape_cast %39 : vector<4xf32> to vector<4x1xf32>
    %41 = arith.addf %38, %40 : vector<4x1xf32>
    %c0_26 = arith.constant 0 : index
    %c0_27 = arith.constant 0 : index
    %42 = vector.load %arg9[%c0_26, %c0_27] : memref<4x1xf32, #tpu.memory_space<vmem>>, vector<4x1xf32>
    tpu.vector_store %arg9[%c0_26, %c0_27], %41 {strides = array<i32>} : memref<4x1xf32, #tpu.memory_space<vmem>>, vector<4x1xf32>,
    %c0_28 = arith.constant 0 : index
    %c0_29 = arith.constant 0 : index
    %43 = vector.load %arg10[%c0_28, %c0_29] : memref<4x1xf32, #tpu.memory_space<vmem>>, vector<4x1xf32>
    %44 = arith.mulf %26, %26 : vector<4x256xf32>
    %cst_30 = arith.constant dense<0.000000e+00> : vector<4xf32>
    %45 = vector.multi_reduction <add>, %44, %cst_30 [1] : vector<4x256xf32> to vector<4xf32>
    %46 = vector.shape_cast %45 : vector<4xf32> to vector<4x1xf32>
    %47 = arith.addf %43, %46 : vector<4x1xf32>
    %c0_31 = arith.constant 0 : index
    %c0_32 = arith.constant 0 : index
    %48 = vector.load %arg10[%c0_31, %c0_32] : memref<4x1xf32, #tpu.memory_space<vmem>>, vector<4x1xf32>
    tpu.vector_store %arg10[%c0_31, %c0_32], %47 {strides = array<i32>} : memref<4x1xf32, #tpu.memory_space<vmem>>, vector<4x1xf32>,
    return
  }
  func.func @transform_0(%arg0: i32) -> (i32, i32) {
    %c0_i32 = arith.constant 0 : i32
    %c0_i32_0 = arith.constant 0 : i32
    return %c0_i32, %arg0 : i32, i32
  }
  func.func @transform_1(%arg0: i32) -> (i32, i32) {
    %c0_i32 = arith.constant 0 : i32
    %c0_i32_0 = arith.constant 0 : i32
    return %c0_i32, %arg0 : i32, i32
  }
  func.func @transform_2(%arg0: i32) -> (i32, i32) {
    %c0_i32 = arith.constant 0 : i32
    %c0_i32_0 = arith.constant 0 : i32
    %c0_i32_1 = arith.constant 0 : i32
    return %c0_i32, %c0_i32_0 : i32, i32
  }
  func.func @transform_3(%arg0: i32) -> (i32, i32) {
    %c0_i32 = arith.constant 0 : i32
    %c0_i32_0 = arith.constant 0 : i32
    %c0_i32_1 = arith.constant 0 : i32
    return %c0_i32, %c0_i32_0 : i32, i32
  }
  func.func @transform_4(%arg0: i32) -> (i32, i32) {
    %c0_i32 = arith.constant 0 : i32
    %c0_i32_0 = arith.constant 0 : i32
    %c0_i32_1 = arith.constant 0 : i32
    return %c0_i32, %c0_i32_0 : i32, i32
  }
  func.func @transform_5(%arg0: i32) -> (i32, i32) {
    %c0_i32 = arith.constant 0 : i32
    %c0_i32_0 = arith.constant 0 : i32
    %c0_i32_1 = arith.constant 0 : i32
    return %c0_i32, %c0_i32_0 : i32, i32
  }
  func.func @transform_6(%arg0: i32) -> (i32, i32) {
    %c0_i32 = arith.constant 0 : i32
    %c0_i32_0 = arith.constant 0 : i32
    %c0_i32_1 = arith.constant 0 : i32
    return %c0_i32, %c0_i32_0 : i32, i32
  }
  func.func @transform_7(%arg0: i32) -> (i32, i32) {
    %c0_i32 = arith.constant 0 : i32
    %c0_i32_0 = arith.constant 0 : i32
    %c0_i32_1 = arith.constant 0 : i32
    return %c0_i32, %c0_i32_0 : i32, i32
  }
  func.func @transform_8(%arg0: i32) -> (i32, i32) {
    %c0_i32 = arith.constant 0 : i32
    %c0_i32_0 = arith.constant 0 : i32
    %c0_i32_1 = arith.constant 0 : i32
    return %c0_i32, %c0_i32_0 : i32, i32
  }
  func.func @transform_9(%arg0: i32) -> (i32, i32) {
    %c0_i32 = arith.constant 0 : i32
    %c0_i32_0 = arith.constant 0 : i32
    %c0_i32_1 = arith.constant 0 : i32
    return %c0_i32, %c0_i32_0 : i32, i32
  }
}

</mosaic_0001>

<llo_original>
// kernel: tpu_custom_call.1
$region0: #{tpu_custom_call.1}
  #allocation0 [shape = 'u32[]', space=smem, size = 0x4, offset = 0x4, fixed_abs, tag = 'smem constant byte address 0x4 - core index']
  #allocation1 [shape = 'u32[144,128]{1,0:T(1,128)}', space=vmem, size = 0x12000, scoped, tag = 'internal scratch']
  %s0 = inlined_call_operand.hbm [shape: bf16[8,512], index: 0, kind: input, shape index: {}]
  %s1 = inlined_call_operand.hbm [shape: bf16[8,512], index: 1, kind: input, shape index: {}]
  %s2 = inlined_call_operand.vmem [shape: bf16[4,8], index: 2, kind: input, shape index: {}]
  %s3 = inlined_call_operand.vmem [shape: f32[4,1], index: 3, kind: input, shape index: {}]
  %s4 = inlined_call_operand.vmem [shape: bf16[4,8], index: 4, kind: input, shape index: {}]
  %s5 = inlined_call_operand.vmem [shape: f32[4,1], index: 5, kind: input, shape index: {}]
  %s6 = inlined_call_operand.vmem [shape: f32[4,1], index: 6, kind: output, shape index: {0}]
  %s7 = inlined_call_operand.vmem [shape: f32[4,1], index: 7, kind: output, shape index: {1}]
  %s8 = inlined_call_operand.vmem [shape: f32[4,1], index: 8, kind: output, shape index: {2}]
  %s9 = inlined_call_operand.vmem [shape: f32[4,1], index: 9, kind: output, shape index: {3}]
  %10 = xla_tuple %s6, %s7, %s8, %s9
  %s11 = sld [smem:[#allocation0]]
  $region93: #{tpu_custom_call.1} parent=0
    _
  %s13 = ssub.s32 1, %s11
  %s14 = scalar_select 0, %s13, %s11
  $region1: #{tpu_custom_call.1} parent=0
    #allocation2 [shape = 'u8[8192]{0}', space=vmem, size = 0x2000, scoped, tag = 'input window, operand 0']
    #allocation3 [shape = 's32[2]{0}', space=sflag, size = 0x8, scoped, tag = 'scoped memory for tpu_custom_call.1']
    #allocation4 [shape = 'u8[8192]{0}', space=vmem, size = 0x2000, scoped, tag = 'input window, operand 1']
    #allocation5 [shape = 's32[2]{0}', space=sflag, size = 0x8, scoped, tag = 'scoped memory for tpu_custom_call.1']
    %15 = vsyncpa [#allocation3], 0
    %s16 = scalar_lea.sflag [#allocation3], 1
    %17 = vsyncpa %s16, 0
    %18 = vsyncpa [#allocation5], 0
    %s19 = scalar_lea.sflag [#allocation5], 1
    %20 = vsyncpa %s19, 0
    loop: start=0, step=1, limit=4
    $region2: #{tpu_custom_call.1} parent=1 // loop_pre_header
      _
    $region3: #{tpu_custom_call.1} parent=1 // loop_header
      %s22 = sphi 0, %s26
      %p23 = scmp.ge.s32.totalorder %s22, 4
      %s32 = sphi 0, %s34
      %s35 = sphi 0, %s32
      %s36 = sphi 0, %s35
      %s52 = sphi 0, %s36
      %s58 = sphi 0, %s60
      %s61 = sphi 0, %s58
      %s62 = sphi 0, %s61
      %s78 = sphi 0, %s62
      %s82 = sphi 0, %s82
      %s84 = sphi 0, %s82
      %s85 = sphi 0, %s84
      %s99 = sphi 0, %s85
      %s103 = sphi 0, %s103
      %s105 = sphi 0, %s103
      %s106 = sphi 0, %s105
      %s120 = sphi 0, %s106
      %s124 = sphi 0, %s124
      %s126 = sphi 0, %s124
      %s127 = sphi 0, %s126
      %s141 = sphi 0, %s127
      %s145 = sphi 0, %s145
      %s147 = sphi 0, %s145
      %s148 = sphi 0, %s147
      %s162 = sphi 0, %s148
      %s166 = sphi 0, %s166
      %s168 = sphi 0, %s166
      %s169 = sphi 0, %s168
      %s183 = sphi 0, %s169
      %s187 = sphi 0, %s187
      %s189 = sphi 0, %s187
      %s190 = sphi 0, %s189
      %s204 = sphi 0, %s190
      %s208 = sphi 0, %s208
      %s210 = sphi 0, %s208
      %s211 = sphi 0, %s210
      %s225 = sphi 0, %s211
      %s229 = sphi 0, %s229
      %s231 = sphi 0, %s229
      %s232 = sphi 0, %s231
      %s246 = sphi 0, %s232
    $region4: #{tpu_custom_call.1} parent=1 // loop_header_branch
      %25 = sbr.rel (%p23) target = $region8
    $region5: #{tpu_custom_call.1} parent=1 // loop_body
      %s27 = ssub.s32 %s22, 1
      %s28 = ssub.s32 %s22, 2
      %s29 = sadd.s32 %s22, 1
      %s30 = ssub.s32 %s22, %s29
      %p31 = scmp.eq.s32.totalorder %s30, 0
      %s33 = sadd.s32 %s32, 1
      %s34 = scalar_select %p31, %s32, %s33
      %p37 = pneg %p31
      %p38 = scmp.eq.s32.totalorder %s22, 1
      %p39 = por %p37, %p38
      %p40 = scmp.ne.s32.totalorder %s32, %s35
      %p41 = scmp.eq.s32.totalorder %s22, 0
      %p42 = por %p40, %p41
      %p43 = scmp.ne.s32.totalorder %s32, %s35
      %p44 = scmp.eq.s32.totalorder %s27, 1
      %p45 = por %p43, %p44
      %p46 = scmp.ne.s32.totalorder %s35, %s36
      %p47 = scmp.eq.s32.totalorder %s27, 0
      %p48 = por %p46, %p47
      %p49 = scmp.ne.s32.totalorder %s35, %s36
      %p50 = scmp.eq.s32.totalorder %s28, 1
      %p51 = por %p49, %p50
      %p53 = scmp.ne.s32.totalorder %s36, %s52
      %p54 = scmp.eq.s32.totalorder %s28, 0
      %p55 = por %p53, %p54
      %s56 = ssub.s32 %s22, %s29
      %p57 = scmp.eq.s32.totalorder %s56, 0
      %s59 = sadd.s32 %s58, 1
      %s60 = scalar_select %p57, %s58, %s59
      %p63 = pneg %p57
      %p64 = scmp.eq.s32.totalorder %s22, 1
      %p65 = por %p63, %p64
      %p66 = scmp.ne.s32.totalorder %s58, %s61
      %p67 = scmp.eq.s32.totalorder %s22, 0
      %p68 = por %p66, %p67
      %p69 = scmp.ne.s32.totalorder %s58, %s61
      %p70 = scmp.eq.s32.totalorder %s27, 1
      %p71 = por %p69, %p70
      %p72 = scmp.ne.s32.totalorder %s61, %s62
      %p73 = scmp.eq.s32.totalorder %s27, 0
      %p74 = por %p72, %p73
      %p75 = scmp.ne.s32.totalorder %s61, %s62
      %p76 = scmp.eq.s32.totalorder %s28, 1
      %p77 = por %p75, %p76
      %p79 = scmp.ne.s32.totalorder %s62, %s78
      %p80 = scmp.eq.s32.totalorder %s28, 0
      %p81 = por %p79, %p80
      %s83 = sadd.s32 %s82, 1
      %p86 = scmp.eq.s32.totalorder %s22, 1
      %p87 = scmp.ne.s32.totalorder %s82, %s84
      %p88 = scmp.eq.s32.totalorder %s22, 0
      %p89 = por %p87, %p88
      %p90 = scmp.ne.s32.totalorder %s82, %s84
      %p91 = scmp.eq.s32.totalorder %s27, 1
      %p92 = por %p90, %p91
      %p93 = scmp.ne.s32.totalorder %s84, %s85
      %p94 = scmp.eq.s32.totalorder %s27, 0
      %p95 = por %p93, %p94
      %p96 = scmp.ne.s32.totalorder %s84, %s85
      %p97 = scmp.eq.s32.totalorder %s28, 1
      %p98 = por %p96, %p97
      %p100 = scmp.ne.s32.totalorder %s85, %s99
      %p101 = scmp.eq.s32.totalorder %s28, 0
      %p102 = por %p100, %p101
      %s104 = sadd.s32 %s103, 1
      %p107 = scmp.eq.s32.totalorder %s22, 1
      %p108 = scmp.ne.s32.totalorder %s103, %s105
      %p109 = scmp.eq.s32.totalorder %s22, 0
      %p110 = por %p108, %p109
      %p111 = scmp.ne.s32.totalorder %s103, %s105
      %p112 = scmp.eq.s32.totalorder %s27, 1
      %p113 = por %p111, %p112
      %p114 = scmp.ne.s32.totalorder %s105, %s106
      %p115 = scmp.eq.s32.totalorder %s27, 0
      %p116 = por %p114, %p115
      %p117 = scmp.ne.s32.totalorder %s105, %s106
      %p118 = scmp.eq.s32.totalorder %s28, 1
      %p119 = por %p117, %p118
      %p121 = scmp.ne.s32.totalorder %s106, %s120
      %p122 = scmp.eq.s32.totalorder %s28, 0
      %p123 = por %p121, %p122
      %s125 = sadd.s32 %s124, 1
      %p128 = scmp.eq.s32.totalorder %s22, 1
      %p129 = scmp.ne.s32.totalorder %s124, %s126
      %p130 = scmp.eq.s32.totalorder %s22, 0
      %p131 = por %p129, %p130
      %p132 = scmp.ne.s32.totalorder %s124, %s126
      %p133 = scmp.eq.s32.totalorder %s27, 1
      %p134 = por %p132, %p133
      %p135 = scmp.ne.s32.totalorder %s126, %s127
      %p136 = scmp.eq.s32.totalorder %s27, 0
      %p137 = por %p135, %p136
      %p138 = scmp.ne.s32.totalorder %s126, %s127
      %p139 = scmp.eq.s32.totalorder %s28, 1
      %p140 = por %p138, %p139
      %p142 = scmp.ne.s32.totalorder %s127, %s141
      %p143 = scmp.eq.s32.totalorder %s28, 0
      %p144 = por %p142, %p143
      %s146 = sadd.s32 %s145, 1
      %p149 = scmp.eq.s32.totalorder %s22, 1
      %p150 = scmp.ne.s32.totalorder %s145, %s147
      %p151 = scmp.eq.s32.totalorder %s22, 0
      %p152 = por %p150, %p151
      %p153 = scmp.ne.s32.totalorder %s145, %s147
      %p154 = scmp.eq.s32.totalorder %s27, 1
      %p155 = por %p153, %p154
      %p156 = scmp.ne.s32.totalorder %s147, %s148
      %p157 = scmp.eq.s32.totalorder %s27, 0
      %p158 = por %p156, %p157
      %p159 = scmp.ne.s32.totalorder %s147, %s148
      %p160 = scmp.eq.s32.totalorder %s28, 1
      %p161 = por %p159, %p160
      %p163 = scmp.ne.s32.totalorder %s148, %s162
      %p164 = scmp.eq.s32.totalorder %s28, 0
      %p165 = por %p163, %p164
      %s167 = sadd.s32 %s166, 1
      %p170 = scmp.eq.s32.totalorder %s22, 1
      %p171 = scmp.ne.s32.totalorder %s166, %s168
      %p172 = scmp.eq.s32.totalorder %s22, 0
      %p173 = por %p171, %p172
      %p174 = scmp.ne.s32.totalorder %s166, %s168
      %p175 = scmp.eq.s32.totalorder %s27, 1
      %p176 = por %p174, %p175
      %p177 = scmp.ne.s32.totalorder %s168, %s169
      %p178 = scmp.eq.s32.totalorder %s27, 0
      %p179 = por %p177, %p178
      %p180 = scmp.ne.s32.totalorder %s168, %s169
      %p181 = scmp.eq.s32.totalorder %s28, 1
      %p182 = por %p180, %p181
      %p184 = scmp.ne.s32.totalorder %s169, %s183
      %p185 = scmp.eq.s32.totalorder %s28, 0
      %p186 = por %p184, %p185
      %s188 = sadd.s32 %s187, 1
      %p191 = scmp.eq.s32.totalorder %s22, 1
      %p192 = scmp.ne.s32.totalorder %s187, %s189
      %p193 = scmp.eq.s32.totalorder %s22, 0
      %p194 = por %p192, %p193
      %p195 = scmp.ne.s32.totalorder %s187, %s189
      %p196 = scmp.eq.s32.totalorder %s27, 1
      %p197 = por %p195, %p196
      %p198 = scmp.ne.s32.totalorder %s189, %s190
      %p199 = scmp.eq.s32.totalorder %s27, 0
      %p200 = por %p198, %p199
      %p201 = scmp.ne.s32.totalorder %s189, %s190
      %p202 = scmp.eq.s32.totalorder %s28, 1
      %p203 = por %p201, %p202
      %p205 = scmp.ne.s32.totalorder %s190, %s204
      %p206 = scmp.eq.s32.totalorder %s28, 0
      %p207 = por %p205, %p206
      %s209 = sadd.s32 %s208, 1
      %p212 = scmp.eq.s32.totalorder %s22, 1
      %p213 = scmp.ne.s32.totalorder %s208, %s210
      %p214 = scmp.eq.s32.totalorder %s22, 0
      %p215 = por %p213, %p214
      %p216 = scmp.ne.s32.totalorder %s208, %s210
      %p217 = scmp.eq.s32.totalorder %s27, 1
      %p218 = por %p216, %p217
      %p219 = scmp.ne.s32.totalorder %s210, %s211
      %p220 = scmp.eq.s32.totalorder %s27, 0
      %p221 = por %p219, %p220
      %p222 = scmp.ne.s32.totalorder %s210, %s211
      %p223 = scmp.eq.s32.totalorder %s28, 1
      %p224 = por %p222, %p223
      %p226 = scmp.ne.s32.totalorder %s211, %s225
      %p227 = scmp.eq.s32.totalorder %s28, 0
      %p228 = por %p226, %p227
      %s230 = sadd.s32 %s229, 1
      %p233 = scmp.eq.s32.totalorder %s22, 1
      %p234 = scmp.ne.s32.totalorder %s229, %s231
      %p235 = scmp.eq.s32.totalorder %s22, 0
      %p236 = por %p234, %p235
      %p237 = scmp.ne.s32.totalorder %s229, %s231
      %p238 = scmp.eq.s32.totalorder %s27, 1
      %p239 = por %p237, %p238
      %p240 = scmp.ne.s32.totalorder %s231, %s232
      %p241 = scmp.eq.s32.totalorder %s27, 0
      %p242 = por %p240, %p241
      %p243 = scmp.ne.s32.totalorder %s231, %s232
      %p244 = scmp.eq.s32.totalorder %s28, 1
      %p245 = por %p243, %p244
      %p247 = scmp.ne.s32.totalorder %s232, %s246
      %p248 = scmp.eq.s32.totalorder %s28, 0
      %p249 = por %p247, %p248
      %p250 = scmp.le.s32.totalorder 1, %s22
      %p251 = scmp.lt.s32.totalorder %s22, 3
      %p252 = pnand %p250, %p251
      %p253 = pneg %p252
      // Predicated region
      $region9: #{tpu_custom_call.1} parent=5 // pred_check
        _
      $region10: #{tpu_custom_call.1} parent=5 // pred_check_branch
        %255 = sbr.rel (%p252) target = $region12
      $region11: #{tpu_custom_call.1} parent=5 // pred_region
        %s256 = ssub.s32 %s22, 1
        // Predicated region
        $region13: #{tpu_custom_call.1} parent=11 // pred_check
          %p257 = pneg %p95
        $region14: #{tpu_custom_call.1} parent=11 // pred_check_branch
          %259 = sbr.rel (%p257) target = $region16
        $region15: #{tpu_custom_call.1} parent=11 // pred_region
          _
        $region16: #{tpu_custom_call.1} parent=11 // pred_fallthru
          _
        // Predicated region
        $region17: #{tpu_custom_call.1} parent=11 // pred_check
          %p260 = pneg %p116
        $region18: #{tpu_custom_call.1} parent=11 // pred_check_branch
          %262 = sbr.rel (%p260) target = $region20
        $region19: #{tpu_custom_call.1} parent=11 // pred_region
          _
        $region20: #{tpu_custom_call.1} parent=11 // pred_fallthru
          _
        // Predicated region
        $region21: #{tpu_custom_call.1} parent=11 // pred_check
          %p263 = pneg %p137
        $region22: #{tpu_custom_call.1} parent=11 // pred_check_branch
          %265 = sbr.rel (%p263) target = $region24
        $region23: #{tpu_custom_call.1} parent=11 // pred_region
          _
        $region24: #{tpu_custom_call.1} parent=11 // pred_fallthru
          _
        // Predicated region
        $region25: #{tpu_custom_call.1} parent=11 // pred_check
          %p266 = pneg %p158
        $region26: #{tpu_custom_call.1} parent=11 // pred_check_branch
          %268 = sbr.rel (%p266) target = $region28
        $region27: #{tpu_custom_call.1} parent=11 // pred_region
          _
        $region28: #{tpu_custom_call.1} parent=11 // pred_fallthru
          _
      $region12: #{tpu_custom_call.1} parent=5 // pred_fallthru
        _
      %p269 = scmp.lt.s32.totalorder %s22, 2
      // Predicated region
      $region29: #{tpu_custom_call.1} parent=5 // pred_check
        %p270 = pneg %p269
      $region30: #{tpu_custom_call.1} parent=5 // pred_check_branch
        %272 = sbr.rel (%p270) target = $region32
      $region31: #{tpu_custom_call.1} parent=5 // pred_region
        // Predicated region
        $region33: #{tpu_custom_call.1} parent=31 // pred_check
          %p273 = pneg %p42
        $region34: #{tpu_custom_call.1} parent=31 // pred_check_branch
          %275 = sbr.rel (%p273) target = $region36
        $region35: #{tpu_custom_call.1} parent=31 // pred_region
          %s276 = sand.u32 %s32, 1
          %s277 = scalar_lea.sflag [#allocation3], %s276
          %s278 = sand.u32 %s32, 1
          %s279 = smul.addr %s278, 8
          %s280 = scalar_lea.vmem [#allocation2], %s279
          %s281 = smul.u32 2, %s22
          %s283 = ssub.s32 128, 128
          %284 = vsyncadd %s277, %s283
          %s285 = smul.addr %s281, 64
          %s286 = scalar_lea.hbm %s0, %s285
          %s288 = sshll.u32 %s280, 4
          %s289 = int_to_ptr.vmem [resolvable:$true] %s288
          %291 = dma.hbm_to_vmem [thread:$0]  %s286, 128, %s289, %s277
        $region36: #{tpu_custom_call.1} parent=31 // pred_fallthru
          _
        // Predicated region
        $region37: #{tpu_custom_call.1} parent=31 // pred_check
          %p292 = pneg %p68
        $region38: #{tpu_custom_call.1} parent=31 // pred_check_branch
          %294 = sbr.rel (%p292) target = $region40
        $region39: #{tpu_custom_call.1} parent=31 // pred_region
          %s295 = sand.u32 %s58, 1
          %s296 = scalar_lea.sflag [#allocation5], %s295
          %s297 = sand.u32 %s58, 1
          %s298 = smul.addr %s297, 8
          %s299 = scalar_lea.vmem [#allocation4], %s298
          %s300 = smul.u32 2, %s22
          %s302 = ssub.s32 128, 128
          %303 = vsyncadd %s296, %s302
          %s304 = smul.addr %s300, 64
          %s305 = scalar_lea.hbm %s1, %s304
          %s307 = sshll.u32 %s299, 4
          %s308 = int_to_ptr.vmem [resolvable:$true] %s307
          %310 = dma.hbm_to_vmem [thread:$0]  %s305, 128, %s308, %s296
        $region40: #{tpu_custom_call.1} parent=31 // pred_fallthru
          _
      $region32: #{tpu_custom_call.1} parent=5 // pred_fallthru
        _
      %p311 = scmp.le.s32.totalorder 1, %s22
      %p312 = scmp.lt.s32.totalorder %s22, 3
      %p313 = pnand %p311, %p312
      %p314 = pneg %p313
      // Predicated region
      $region41: #{tpu_custom_call.1} parent=5 // pred_check
        _
      $region42: #{tpu_custom_call.1} parent=5 // pred_check_branch
        %316 = sbr.rel (%p313) target = $region44
      $region43: #{tpu_custom_call.1} parent=5 // pred_region
        %s317 = ssub.s32 %s22, 1
        %s318 = sand.u32 %s35, 1
        %s319 = scalar_lea.sflag [#allocation3], %s318
        %s320 = sand.u32 %s35, 1
        %s321 = smul.addr %s320, 8
        %s322 = scalar_lea.vmem [#allocation2], %s321
        // Predicated region
        $region45: #{tpu_custom_call.1} parent=43 // pred_check
          %p323 = pneg %p48
        $region46: #{tpu_custom_call.1} parent=43 // pred_check_branch
          %325 = sbr.rel (%p323) target = $region48
        $region47: #{tpu_custom_call.1} parent=43 // pred_region
          %326 = dma.done %s319, 128
        $region48: #{tpu_custom_call.1} parent=43 // pred_fallthru
          _
        %s327 = sand.u32 %s61, 1
        %s328 = scalar_lea.sflag [#allocation5], %s327
        %s329 = sand.u32 %s61, 1
        %s330 = smul.addr %s329, 8
        %s331 = scalar_lea.vmem [#allocation4], %s330
        // Predicated region
        $region49: #{tpu_custom_call.1} parent=43 // pred_check
          %p332 = pneg %p74
        $region50: #{tpu_custom_call.1} parent=43 // pred_check_branch
          %334 = sbr.rel (%p332) target = $region52
        $region51: #{tpu_custom_call.1} parent=43 // pred_region
          %335 = dma.done %s328, 128
        $region52: #{tpu_custom_call.1} parent=43 // pred_fallthru
          _
        %s336 = sand.u32 %s35, 1
        %s337 = scalar_lea.sflag [#allocation3], %s336
        %s338 = sand.u32 %s35, 1
        %s339 = smul.addr %s338, 8
        %s340 = scalar_lea.vmem [#allocation2], %s339
        %p341 = pneg %p48
        %p342 = pneg %p45
        %s343 = sand.u32 %s61, 1
        %s344 = scalar_lea.sflag [#allocation5], %s343
        %s345 = sand.u32 %s61, 1
        %s346 = smul.addr %s345, 8
        %s347 = scalar_lea.vmem [#allocation4], %s346
        %p348 = pneg %p74
        %p349 = pneg %p71
        %p350 = pneg %p95
        %p351 = pneg %p92
        %p352 = pneg %p116
        %p353 = pneg %p113
        %p354 = pneg %p137
        %p355 = pneg %p134
        %p356 = pneg %p158
        %p357 = pneg %p155
        %p358 = pneg %p179
        %p359 = pneg %p176
        %p360 = pneg %p200
        %p361 = pneg %p197
        %p362 = pneg %p221
        %p363 = pneg %p218
        %p364 = pneg %p242
        %p365 = pneg %p239
        %s366 = smul.u32 2, %s27
        %s367 = smul.u32 2, %s27
        %p369 = scmp.eq.s32.totalorder %s27, 0
        // Predicated region
        $region53: #{tpu_custom_call.1} parent=43 // pred_check
          %p370 = pneg %p369
        $region54: #{tpu_custom_call.1} parent=43 // pred_check_branch
          %372 = sbr.rel (%p370) target = $region56
        $region55: #{tpu_custom_call.1} parent=43 // pred_region
          %vm373 = vcmask 3072
          %374 = vst.msk [vmem:[%s6] sm:$0xf] %vm373, 0.0
          %375 = vst.msk [vmem:[%s7] sm:$0xf] %vm373, 0.0
          %376 = vst.msk [vmem:[%s8] sm:$0xf] %vm373, 0.0
          %377 = vst.msk [vmem:[%s9] sm:$0xf] %vm373, 0.0
        $region56: #{tpu_custom_call.1} parent=43 // pred_fallthru
          _
        %v378 = vlaneseq
        %v379 = vand.u32 %v378, 127
        %v380 = vadd.s32 %v379, 128
        %s381 = smul.u32 %s27, 256
        %v382 = vstv %s381
        %v383 = vadd.s32 %v379, %v382
        %v384 = vadd.s32 %v380, %v382
        %vm385 = vcmp.lt.s32.totalorder %v383, 392
        %vm386 = vcmp.lt.s32.totalorder %v384, 392
        %v387 = vsel %vm385, 1, 0
        %v388 = vsel %vm386, 1, 0
        %v389 = vcvt.s32.f32 %v387
        %v390 = vcvt.s32.f32 %v388
        %v391 = vld [vmem:[%s2] sm:$0x3]
        %v392 = vld [vmem:[%s322] sm:$0xff]
        %v393 = vld [vmem:[%s3] sm:$0xf]
        %395 = vset.pattern.permute.xlu0 0
        %396 = vperm.xlu0 %395, %v393
        %v397 = vpop.permute.xlu0 %396
        %v400 = vunpack.c.l.b16 %v392
        %v401 = vunpack.c.h.b16 %v392
        %v402 = vpack.c.b16 %v400, %v400
        %v403 = vpack.c.b16 %v401, %v401
        %vm404 = vcmask 64512
        %v406 = vsel %vm404, %v391, 0
        %vm408 = vcmask 1043456
        %v410 = vsel %vm408, %v402, 0
        %v413 = vsel %vm408, %v403, 0
        %415 = vmatprep.subr.bf16.mxu0 %v413
        %416 = vmatpush1.bf16.msra.mxu0 %v410
        %417 = vmatprep.subr.bf16.mxu0 0
        %418 = vmatpush1.bf16.msra.mxu0 0
        %419 = vmatprep.subr.bf16.mxu0 0
        %420 = vmatpush1.bf16.msra.mxu0 0
        %421 = vmatprep.subr.bf16.mxu0 0
        %422 = vmatpush1.bf16.msra.mxu0 0
        %423 = vmatprep.subr.bf16.mxu0 0
        %424 = vmatpush1.bf16.msra.mxu0 0
        %425 = vmatprep.subr.bf16.mxu0 0
        %426 = vmatpush1.bf16.msra.mxu0 0
        %427 = vmatprep.subr.bf16.mxu0 0
        %428 = vmatpush1.bf16.msra.mxu0 0
        %429 = vmatprep.subr.bf16.mxu0 0
        %430 = vmatpush1.bf16.msra.mxu0 0
        %431 = vmatprep.subr.bf16.mxu0 0
        %432 = vmatpush1.bf16.msra.mxu0 0
        %433 = vmatprep.subr.bf16.mxu0 0
        %434 = vmatpush1.bf16.msra.mxu0 0
        %435 = vmatprep.subr.bf16.mxu0 0
        %436 = vmatpush1.bf16.msra.mxu0 0
        %437 = vmatprep.subr.bf16.mxu0 0
        %438 = vmatpush1.bf16.msra.mxu0 0
        %439 = vmatprep.subr.bf16.mxu0 0
        %440 = vmatpush1.bf16.msra.mxu0 0
        %441 = vmatprep.subr.bf16.mxu0 0
        %442 = vmatpush1.bf16.msra.mxu0 0
        %443 = vmatprep.subr.bf16.mxu0 0
        %444 = vmatpush1.bf16.msra.mxu0 0
        %445 = vmatprep.subr.bf16.mxu0 0
        %446 = vmatpush1.bf16.msra.mxu0 0
        %447 = vmatprep.mubr.bf16.mxu0 0
        %448 = vmatmul.mubr.bf16.gmra.mrb[0].mxu0 %v406
        %v449 = vpop.f32.mrb[0].mxu0
        %v450 = vadd.f32 %v397, %v449
        %v451 = vpop.f32.mrb[0].mxu0
        %v452 = vadd.f32 %v397, %v451
        %v453 = vpop.f32.mrb[0].mxu0
        %v454 = vpop.f32.mrb[0].mxu0
        %455 = vdwg.mxu0
        %v456 = vld [vmem:[%s4] sm:$0x3]
        %v457 = vld [vmem:[%s331] sm:$0xff]
        %v458 = vld [vmem:[%s5] sm:$0xf]
        %460 = vset.pattern.permute.xlu0 0
        %461 = vperm.xlu0 %460, %v458
        %v462 = vpop.permute.xlu0 %461
        %v465 = vunpack.c.l.b16 %v457
        %v466 = vunpack.c.h.b16 %v457
        %v467 = vpack.c.b16 %v465, %v465
        %v468 = vpack.c.b16 %v466, %v466
        %v470 = vsel %vm404, %v456, 0
        %v473 = vsel %vm408, %v467, 0
        %v476 = vsel %vm408, %v468, 0
        %478 = vmatprep.subr.bf16.mxu0 %v476
        %479 = vmatpush1.bf16.msra.mxu0 %v473
        %480 = vmatprep.subr.bf16.mxu0 0
        %481 = vmatpush1.bf16.msra.mxu0 0
        %482 = vmatprep.subr.bf16.mxu0 0
        %483 = vmatpush1.bf16.msra.mxu0 0
        %484 = vmatprep.subr.bf16.mxu0 0
        %485 = vmatpush1.bf16.msra.mxu0 0
        %486 = vmatprep.subr.bf16.mxu0 0
        %487 = vmatpush1.bf16.msra.mxu0 0
        %488 = vmatprep.subr.bf16.mxu0 0
        %489 = vmatpush1.bf16.msra.mxu0 0
        %490 = vmatprep.subr.bf16.mxu0 0
        %491 = vmatpush1.bf16.msra.mxu0 0
        %492 = vmatprep.subr.bf16.mxu0 0
        %493 = vmatpush1.bf16.msra.mxu0 0
        %494 = vmatprep.subr.bf16.mxu0 0
        %495 = vmatpush1.bf16.msra.mxu0 0
        %496 = vmatprep.subr.bf16.mxu0 0
        %497 = vmatpush1.bf16.msra.mxu0 0
        %498 = vmatprep.subr.bf16.mxu0 0
        %499 = vmatpush1.bf16.msra.mxu0 0
        %500 = vmatprep.subr.bf16.mxu0 0
        %501 = vmatpush1.bf16.msra.mxu0 0
        %502 = vmatprep.subr.bf16.mxu0 0
        %503 = vmatpush1.bf16.msra.mxu0 0
        %504 = vmatprep.subr.bf16.mxu0 0
        %505 = vmatpush1.bf16.msra.mxu0 0
        %506 = vmatprep.subr.bf16.mxu0 0
        %507 = vmatpush1.bf16.msra.mxu0 0
        %508 = vmatprep.subr.bf16.mxu0 0
        %509 = vmatpush1.bf16.msra.mxu0 0
        %510 = vmatprep.mubr.bf16.mxu0 0
        %511 = vmatmul.mubr.bf16.gmra.mrb[0].mxu0 %v470
        %v512 = vpop.f32.mrb[0].mxu0
        %v513 = vadd.f32 %v462, %v512
        %v514 = vpop.f32.mrb[0].mxu0
        %v515 = vadd.f32 %v462, %v514
        %v516 = vpop.f32.mrb[0].mxu0
        %v517 = vpop.f32.mrb[0].mxu0
        %518 = vdwg.mxu0
        %v519 = vmul.f32 %v450, %v389
        %v520 = vmul.f32 %v452, %v390
        %v521 = vmul.f32 %v513, %v389
        %v522 = vmul.f32 %v515, %v390
        %v523 = vld [vmem:[%s6] sm:$0xf]
        %v524 = vsel %vm408, %v519, 0.0
        %v525 = vsel %vm408, %v520, 0.0
        %v526 = vadd.f32 %v524, %v525
        %527 = vadd.xlane.f32.xlu0 %v526
        %v528 = vpop.xlane.xlu0 %527
        %v529 = vadd.f32 %v523, %v528
        %vm530 = vcmask 3072
        %531 = vst.msk [vmem:[%s6] sm:$0xf] %vm530, %v529
        %v532 = vld [vmem:[%s7] sm:$0xf]
        %v533 = vmul.f32 %v519, %v519
        %v534 = vmul.f32 %v520, %v520
        %v535 = vsel %vm408, %v533, 0.0
        %v536 = vsel %vm408, %v534, 0.0
        %v537 = vadd.f32 %v535, %v536
        %538 = vadd.xlane.f32.xlu0 %v537
        %v539 = vpop.xlane.xlu0 %538
        %v540 = vadd.f32 %v532, %v539
        %541 = vst.msk [vmem:[%s7] sm:$0xf] %vm530, %v540
        %v542 = vld [vmem:[%s8] sm:$0xf]
        %v543 = vsel %vm408, %v521, 0.0
        %v544 = vsel %vm408, %v522, 0.0
        %v545 = vadd.f32 %v543, %v544
        %546 = vadd.xlane.f32.xlu0 %v545
        %v547 = vpop.xlane.xlu0 %546
        %v548 = vadd.f32 %v542, %v547
        %549 = vst.msk [vmem:[%s8] sm:$0xf] %vm530, %v548
        %v550 = vld [vmem:[%s9] sm:$0xf]
        %v551 = vmul.f32 %v521, %v521
        %v552 = vmul.f32 %v522, %v522
        %v553 = vsel %vm408, %v551, 0.0
        %v554 = vsel %vm408, %v552, 0.0
        %v555 = vadd.f32 %v553, %v554
        %556 = vadd.xlane.f32.xlu0 %v555
        %v557 = vpop.xlane.xlu0 %556
        %v558 = vadd.f32 %v550, %v557
        %559 = vst.msk [vmem:[%s9] sm:$0xf] %vm530, %v558
        // Predicated region
        $region57: #{tpu_custom_call.1} parent=43 // pred_check
          %p560 = pneg %p176
        $region58: #{tpu_custom_call.1} parent=43 // pred_check_branch
          %562 = sbr.rel (%p560) target = $region60
        $region59: #{tpu_custom_call.1} parent=43 // pred_region
          _
        $region60: #{tpu_custom_call.1} parent=43 // pred_fallthru
          _
        // Predicated region
        $region61: #{tpu_custom_call.1} parent=43 // pred_check
          %p563 = pneg %p197
        $region62: #{tpu_custom_call.1} parent=43 // pred_check_branch
          %565 = sbr.rel (%p563) target = $region64
        $region63: #{tpu_custom_call.1} parent=43 // pred_region
          _
        $region64: #{tpu_custom_call.1} parent=43 // pred_fallthru
          _
        // Predicated region
        $region65: #{tpu_custom_call.1} parent=43 // pred_check
          %p566 = pneg %p218
        $region66: #{tpu_custom_call.1} parent=43 // pred_check_branch
          %568 = sbr.rel (%p566) target = $region68
        $region67: #{tpu_custom_call.1} parent=43 // pred_region
          _
        $region68: #{tpu_custom_call.1} parent=43 // pred_fallthru
          _
        // Predicated region
        $region69: #{tpu_custom_call.1} parent=43 // pred_check
          %p569 = pneg %p239
        $region70: #{tpu_custom_call.1} parent=43 // pred_check_branch
          %571 = sbr.rel (%p569) target = $region72
        $region71: #{tpu_custom_call.1} parent=43 // pred_region
          _
        $region72: #{tpu_custom_call.1} parent=43 // pred_fallthru
          _
        // Predicated region
        $region73: #{tpu_custom_call.1} parent=43 // pred_check
          %p572 = pneg %p176
        $region74: #{tpu_custom_call.1} parent=43 // pred_check_branch
          %574 = sbr.rel (%p572) target = $region76
        $region75: #{tpu_custom_call.1} parent=43 // pred_region
          _
        $region76: #{tpu_custom_call.1} parent=43 // pred_fallthru
          _
        // Predicated region
        $region77: #{tpu_custom_call.1} parent=43 // pred_check
          %p575 = pneg %p197
        $region78: #{tpu_custom_call.1} parent=43 // pred_check_branch
          %577 = sbr.rel (%p575) target = $region80
        $region79: #{tpu_custom_call.1} parent=43 // pred_region
          _
        $region80: #{tpu_custom_call.1} parent=43 // pred_fallthru
          _
        // Predicated region
        $region81: #{tpu_custom_call.1} parent=43 // pred_check
          %p578 = pneg %p218
        $region82: #{tpu_custom_call.1} parent=43 // pred_check_branch
          %580 = sbr.rel (%p578) target = $region84
        $region83: #{tpu_custom_call.1} parent=43 // pred_region
          _
        $region84: #{tpu_custom_call.1} parent=43 // pred_fallthru
          _
        // Predicated region
        $region85: #{tpu_custom_call.1} parent=43 // pred_check
          %p581 = pneg %p239
        $region86: #{tpu_custom_call.1} parent=43 // pred_check_branch
          %583 = sbr.rel (%p581) target = $region88
        $region87: #{tpu_custom_call.1} parent=43 // pred_region
          _
        $region88: #{tpu_custom_call.1} parent=43 // pred_fallthru
          _
      $region44: #{tpu_custom_call.1} parent=5 // pred_fallthru
        _
      %p584 = scmp.le.s32.totalorder 2, %s22
      // Predicated region
      $region89: #{tpu_custom_call.1} parent=5 // pred_check
        %p585 = pneg %p584
      $region90: #{tpu_custom_call.1} parent=5 // pred_check_branch
        %587 = sbr.rel (%p585) target = $region92
      $region91: #{tpu_custom_call.1} parent=5 // pred_region
        %s588 = ssub.s32 %s22, 2
      $region92: #{tpu_custom_call.1} parent=5 // pred_fallthru
        _
    $region6: #{tpu_custom_call.1} parent=1 // loop_footer
      %s26 = sadd.s32 1, %s22
    $region7: #{tpu_custom_call.1} parent=1 // loop_footer_branch
      %21 = sbr.rel target = $region3
    $region8: #{tpu_custom_call.1} parent=1 // loop_exit
      _
    %589 = vsyncpa [#allocation3], 1
    %s590 = scalar_lea.sflag [#allocation3], 1
    %591 = vsyncpa %s590, 1
    %592 = vsyncpa [#allocation5], 1
    %s593 = scalar_lea.sflag [#allocation5], 1
    %594 = vsyncpa %s593, 1

</llo_original>
